<compile_context>
chip_gen: v7x
topology: tpu7x:2x2x1
jax: 0.10.0
libtpu: 0.0.40
codegen_flags: <defaults>
</compile_context>

<pallas_src>
import jax
import jax.numpy as jnp
from jax import lax
from jax.experimental import pallas as pl
from jax.experimental.pallas import tpu as pltpu


# Contract dim 1 of both operands: x[tm, tk] @ (w[tn, tk])^T  (NT matmul).
_NT_DIMS = (((1,), (1,)), ((), ()))


def _linear_kernel_fullk(x_ref, w_ref, b_ref, o_ref):
    """Single K step: whole contraction in one MXU dot, bias added in epilogue."""
    y = lax.dot_general(x_ref[...], w_ref[...], dimension_numbers=_NT_DIMS,
                        preferred_element_type=jnp.float32)
    o_ref[...] = (y + b_ref[...].astype(jnp.float32)).astype(o_ref.dtype)


def _linear_kernel_ktiled(x_ref, w_ref, b_ref, o_ref, acc_ref):
    """K-tiled fallback: f32 VMEM accumulator, bias folded into k==0 init."""
    k = pl.program_id(2)

    @pl.when(k == 0)
    def _():
        acc_ref[...] = jnp.broadcast_to(
            b_ref[...].astype(jnp.float32), acc_ref.shape)

    acc_ref[...] += lax.dot_general(
        x_ref[...], w_ref[...], dimension_numbers=_NT_DIMS,
        preferred_element_type=jnp.float32)

    @pl.when(k == pl.num_programs(2) - 1)
    def _():
        o_ref[...] = acc_ref[...].astype(o_ref.dtype)


# --------------------------------------------------------------------------- #
# Tile selection helpers
# --------------------------------------------------------------------------- #
def _round_up(x, m):
    return ((x + m - 1) // m) * m


def _round_down(x, m):
    return (x // m) * m


def _sublane_multiple(dtype):
    # f32 -> 8, bf16 -> 16, int8/fp8 -> 32 (sub-32-bit dtypes pack along sublanes).
    return max(8, 32 // max(1, jnp.dtype(dtype).itemsize))


def _lane_multiple(dim):
    # Prefer 256-multiples (v6e/v7x 256x256 MXU); 256 is also a 128-multiple so
    # it stays legal/efficient on v5e. Fall back to 128, else the full dim.
    if dim % 256 == 0:
        return 256
    if dim % 128 == 0:
        return 128
    return dim


def _pick_div_tile(dim, cap, multiple):
    """Largest divisor of `dim` <= cap that is a multiple of `multiple`;
    falls back to the full dim (always a legal block size)."""
    if multiple >= dim or dim % multiple != 0:
        return dim
    t = min(_round_down(cap, multiple), dim)
    while t >= multiple:
        if dim % t == 0:
            return t
        t -= multiple
    return dim


def _tn_candidates(V, n_mult, cap=2048):
    if V % n_mult != 0 or V <= n_mult:
        return [V]
    cands = []
    t = min(_round_down(cap, n_mult), V)
    while t >= n_mult:
        if V % t == 0:
            cands.append(t)
        t -= n_mult
    return cands or [V]


def _vmem_budget():
    """(tile-footprint budget, vmem_limit_bytes) from the chip's real VMEM."""
    try:
        cap = int(pltpu.get_tpu_info().vmem_capacity_bytes)
    except Exception:  # no TPU info available -> conservative (v7x per-TC) size
        cap = 64 << 20
    budget = (cap * 11) // 20      # ~55% of physical for double-buffered tiles
    vmem_limit = (cap * 3) // 4    # request ~75% of physical from Mosaic
    return budget, vmem_limit


def _footprint(tm, tn, tk, xb, wb, ob, k_tiled):
    f = 2 * (tm * tk * xb + tn * tk * wb + tn * 4)   # double-buffered inputs
    f += 2 * tm * tn * ob                            # double-buffered output
    if k_tiled:
        f += tm * tn * 4                             # f32 accumulator scratch
    return f


def _select_tiles(M, E, V, x_dtype, w_dtype, o_dtype, budget):
    xb = jnp.dtype(x_dtype).itemsize
    wb = jnp.dtype(w_dtype).itemsize
    ob = jnp.dtype(o_dtype).itemsize
    m_mult = _sublane_multiple(x_dtype)
    n_mult = _lane_multiple(V)
    tm_cap = max(m_mult, min(2048, _round_up(M, m_mult)))

    def fit_tm(tn, tk, k_tiled):
        tm = tm_cap
        while tm > m_mult and _footprint(tm, tn, tk, xb, wb, ob, k_tiled) > budget:
            tm -= m_mult
        return tm

    # Preferred: single K step (tk == E): no accumulator scratch, no K grid axis.
    best = None
    for tn in _tn_candidates(V, n_mult):
        tm = fit_tm(tn, E, False)
        if _footprint(tm, tn, E, xb, wb, ob, False) > budget:
            continue
        score = 1.0 / tm + 1.0 / tn      # HBM traffic per output ~ (1/tm + 1/tn)
        if best is None or score < best[0]:
            best = (score, tm, tn)
    if best is not None:
        _, tm, tn = best
        return tm, tn, E, False

    # Fallback: K-tiled with an f32 accumulator (very large E and/or tight VMEM).
    tn = _pick_div_tile(V, 1024, n_mult)
    tk = _pick_div_tile(E, 1024, _lane_multiple(E))
    tm = fit_tm(tn, tk, True)
    return tm, tn, tk, True


# --------------------------------------------------------------------------- #
# Public wrapper
# --------------------------------------------------------------------------- #
def projection(x, weight, bias):
    """y = x @ weight.T + bias  (PyTorch nn.Linear semantics).

    x:      [..., emb_dim]
    weight: [vocab_size, emb_dim]   (native nn.Linear layout; NOT transposed)
    bias:   [vocab_size]
    returns [..., vocab_size]
    """
    lead = x.shape[:-1]
    E = x.shape[-1]
    V, E_w = weight.shape
    assert E == E_w, "emb_dim mismatch between x and weight"

    M = 1
    for d in lead:
        M *= d
    x2 = x.reshape(M, E)
    b2 = bias.reshape(1, V)
    out_dtype = x.dtype

    budget, vmem_limit = _vmem_budget()
    tm, tn, tk, k_tiled = _select_tiles(
        M, E, V, x2.dtype, weight.dtype, out_dtype, budget)

    gm = pl.cdiv(M, tm)   # ragged last M block: Pallas masks the partial store
    gn = V // tn          # tn divides V by construction

    if k_tiled:
        grid = (gm, gn, E // tk)
        in_specs = [
            pl.BlockSpec((tm, tk), lambda i, j, k: (i, k)),   # x tile
            pl.BlockSpec((tn, tk), lambda i, j, k: (j, k)),   # weight tile [V,E]
            pl.BlockSpec((1, tn), lambda i, j, k: (0, j)),    # bias tile
        ]
        out_specs = pl.BlockSpec((tm, tn), lambda i, j, k: (i, j))
        scratch = [pltpu.VMEM((tm, tn), jnp.float32)]
        kernel = _linear_kernel_ktiled
        dims = ("parallel", "parallel", "arbitrary")
    else:
        grid = (gm, gn)
        in_specs = [
            pl.BlockSpec((tm, E), lambda i, j: (i, 0)),       # x tile (full K)
            pl.BlockSpec((tn, E), lambda i, j: (j, 0)),       # weight tile [V,E]
            pl.BlockSpec((1, tn), lambda i, j: (0, j)),       # bias tile
        ]
        out_specs = pl.BlockSpec((tm, tn), lambda i, j: (i, j))
        scratch = []
        kernel = _linear_kernel_fullk
        dims = ("parallel", "parallel")

    out2 = pl.pallas_call(
        kernel,
        out_shape=jax.ShapeDtypeStruct((M, V), out_dtype),
        grid_spec=pltpu.PrefetchScalarGridSpec(
            num_scalar_prefetch=0,
            grid=grid,
            in_specs=in_specs,
            out_specs=out_specs,
            scratch_shapes=scratch,
        ),
        compiler_params=pltpu.CompilerParams(
            dimension_semantics=dims,
            vmem_limit_bytes=vmem_limit,
        ),
    )(x2, weight, b2)

    return out2.reshape(*lead, V)


if __name__ == "__main__":
    batch, seq, emb, vocab = 2, 8, 32, 128

    key = jax.random.PRNGKey(0)
    kx, kw, kb = jax.random.split(key, 3)
    x = jax.random.normal(kx, (batch, seq, emb), dtype=jnp.float32)
    # Deterministic stand-in for nn.Linear's parameters (layout [vocab, emb]).
    weight = jax.random.normal(kw, (vocab, emb), dtype=jnp.float32) * 0.05
    bias = jax.random.normal(kb, (vocab,), dtype=jnp.float32) * 0.05

    out = projection(x, weight, bias)
    jax.block_until_ready(out)

    # Pure-JAX reference: y = x @ W.T + b
    ref = jnp.einsum("bse,ve->bsv", x, weight,
                     preferred_element_type=jnp.float32) + bias
    assert out.shape == (batch, seq, vocab)
    assert jnp.allclose(out, ref, atol=1e-3, rtol=1e-3)

    print("KERNEL_OK")
</pallas_src>

<mosaic_0001>
module attributes {stable_mosaic.version = 11 : i64} {
  func.func @_linear_kernel_fullk(%arg0: i32, %arg1: i32, %arg2: memref<16x32xf32, #tpu.memory_space<vmem>>, %arg3: memref<128x32xf32, #tpu.memory_space<vmem>>, %arg4: memref<1x128xf32, #tpu.memory_space<vmem>>, %arg5: memref<16x128xf32, #tpu.memory_space<vmem>>) attributes {dimension_semantics = [#tpu.dimension_semantics<parallel>, #tpu.dimension_semantics<parallel>], iteration_bounds = array<i64: 1, 1>, scalar_prefetch = 0 : i64, scratch_operands = 0 : i64, tpu.core_type = #tpu.core_type<tc>, window_params = [{transform_indices = @transform_0, window_bounds = array<i64: 16, 32>}, {transform_indices = @transform_1, window_bounds = array<i64: 128, 32>}, {transform_indices = @transform_2, window_bounds = array<i64: 1, 128>}, {transform_indices = @transform_3, window_bounds = array<i64: 16, 128>}]} {
    %c0 = arith.constant 0 : index
    %c0_0 = arith.constant 0 : index
    %0 = vector.load %arg2[%c0, %c0_0] : memref<16x32xf32, #tpu.memory_space<vmem>>, vector<16x32xf32>
    %c0_1 = arith.constant 0 : index
    %c0_2 = arith.constant 0 : index
    %1 = vector.load %arg3[%c0_1, %c0_2] : memref<128x32xf32, #tpu.memory_space<vmem>>, vector<128x32xf32>
    %cst = arith.constant dense<0.000000e+00> : vector<16x128xf32>
    %2 = tpu.matmul %0, %1, %cst {dimension_numbers = #tpu.dot_dimension_numbers<[1], [1], [0], [0], [0, 0, 1, 0], [], []>} : vector<16x32xf32>, vector<128x32xf32>, vector<16x128xf32> -> vector<16x128xf32>
    %c0_3 = arith.constant 0 : index
    %c0_4 = arith.constant 0 : index
    %3 = vector.load %arg4[%c0_3, %c0_4] : memref<1x128xf32, #tpu.memory_space<vmem>>, vector<1x128xf32>
    %4 = vector.broadcast %3 : vector<1x128xf32> to vector<16x128xf32>
    %5 = arith.addf %2, %4 : vector<16x128xf32>
    %c0_5 = arith.constant 0 : index
    %c0_6 = arith.constant 0 : index
    %6 = vector.load %arg5[%c0_5, %c0_6] : memref<16x128xf32, #tpu.memory_space<vmem>>, vector<16x128xf32>
    tpu.vector_store %arg5[%c0_5, %c0_6], %5 {strides = array<i32>} : memref<16x128xf32, #tpu.memory_space<vmem>>, vector<16x128xf32>,
    return
  }
  func.func @transform_0(%arg0: i32, %arg1: i32) -> (i32, i32) {
    %c0_i32 = arith.constant 0 : i32
    %c0_i32_0 = arith.constant 0 : i32
    return %arg0, %c0_i32 : i32, i32
  }
  func.func @transform_1(%arg0: i32, %arg1: i32) -> (i32, i32) {
    %c0_i32 = arith.constant 0 : i32
    %c0_i32_0 = arith.constant 0 : i32
    return %arg1, %c0_i32 : i32, i32
  }
  func.func @transform_2(%arg0: i32, %arg1: i32) -> (i32, i32) {
    %c0_i32 = arith.constant 0 : i32
    %c0_i32_0 = arith.constant 0 : i32
    return %c0_i32, %arg1 : i32, i32
  }
  func.func @transform_3(%arg0: i32, %arg1: i32) -> (i32, i32) {
    %c0_i32 = arith.constant 0 : i32
    return %arg0, %arg1 : i32, i32
  }
}

</mosaic_0001>

<llo_original>
// kernel: tpu_custom_call.1
$region0: #{tpu_custom_call.1}
  #allocation0 [shape = 'u32[]', space=smem, size = 0x4, offset = 0x4, fixed_abs, tag = 'smem constant byte address 0x4 - core index']
  #allocation1 [shape = 'u32[144,128]{1,0:T(1,128)}', space=vmem, size = 0x12000, scoped, tag = 'internal scratch']
  %s0 = inlined_call_operand.vmem [shape: f32[16,32], index: 0, kind: input, shape index: {}]
  %s1 = inlined_call_operand.vmem [shape: f32[128,32], index: 1, kind: input, shape index: {}]
  %s2 = inlined_call_operand.vmem [shape: f32[1,128], index: 2, kind: input, shape index: {}]
  %s3 = inlined_call_operand.hbm [shape: f32[16,128], index: 3, kind: output, shape index: {}]
  %s4 = sld [smem:[#allocation0]]
  $region22: #{tpu_custom_call.1} parent=0
    _
  %s6 = ssub.s32 1, %s4
  %s7 = scalar_select 0, %s6, %s4
  $region1: #{tpu_custom_call.1} parent=0
    #allocation2 [shape = 'u8[8192]{0}', space=vmem, size = 0x2000, scoped, tag = 'output window, operand 0, single buffered']
    #allocation3 [shape = 's32[1]{0}', space=sflag, size = 0x4, scoped, tag = 'scoped memory for tpu_custom_call.1']
    %8 = vsyncpa [#allocation3], 0
    // Predicated region
    $region2: #{tpu_custom_call.1} parent=1 // pred_check
      _
    $region3: #{tpu_custom_call.1} parent=1 // pred_check_branch
      %10 = sbr.rel (0) target = $region5
    $region4: #{tpu_custom_call.1} parent=1 // pred_region
      _
    $region5: #{tpu_custom_call.1} parent=1 // pred_fallthru
      _
    // Predicated region
    $region6: #{tpu_custom_call.1} parent=1 // pred_check
      _
    $region7: #{tpu_custom_call.1} parent=1 // pred_check_branch
      %12 = sbr.rel (0) target = $region9
    $region8: #{tpu_custom_call.1} parent=1 // pred_region
      _
    $region9: #{tpu_custom_call.1} parent=1 // pred_fallthru
      _
    // Predicated region
    $region10: #{tpu_custom_call.1} parent=1 // pred_check
      _
    $region11: #{tpu_custom_call.1} parent=1 // pred_check_branch
      %14 = sbr.rel (0) target = $region13
    $region12: #{tpu_custom_call.1} parent=1 // pred_region
      _
    $region13: #{tpu_custom_call.1} parent=1 // pred_fallthru
      _
    %v15 = vld [vmem:[%s0] sm:$0xff]
    %v16 = vld [vmem:[%s0 + $0x8] sm:$0xff]
    %v17 = vld [vmem:[%s1] sm:$0xff]
    %v18 = vld [vmem:[%s1 + $0x8] sm:$0xff]
    %v19 = vld [vmem:[%s1 + $0x10] sm:$0xff]
    %v20 = vld [vmem:[%s1 + $0x18] sm:$0xff]
    %v21 = vld [vmem:[%s1 + $0x20] sm:$0xff]
    %v22 = vld [vmem:[%s1 + $0x28] sm:$0xff]
    %v23 = vld [vmem:[%s1 + $0x30] sm:$0xff]
    %v24 = vld [vmem:[%s1 + $0x38] sm:$0xff]
    %v25 = vld [vmem:[%s1 + $0x40] sm:$0xff]
    %v26 = vld [vmem:[%s1 + $0x48] sm:$0xff]
    %v27 = vld [vmem:[%s1 + $0x50] sm:$0xff]
    %v28 = vld [vmem:[%s1 + $0x58] sm:$0xff]
    %v29 = vld [vmem:[%s1 + $0x60] sm:$0xff]
    %v30 = vld [vmem:[%s1 + $0x68] sm:$0xff]
    %v31 = vld [vmem:[%s1 + $0x70] sm:$0xff]
    %v32 = vld [vmem:[%s1 + $0x78] sm:$0xff]
    %v33 = vld [vmem:[%s2] sm:$0x1]
    %v35 = vlaneseq
    %v36 = vshrl.u32 %v35, 7
    %v37 = vsub.s32 0, %v36
    %v38 = vrot.slane %v33, %v37
    %vm40 = vcmask 261120
    %v42 = vsel %vm40, %v15, 0
    %v45 = vsel %vm40, %v16, 0
    %v48 = vsel %vm40, %v17, 0
    %v51 = vsel %vm40, %v18, 0
    %v54 = vsel %vm40, %v19, 0
    %v57 = vsel %vm40, %v20, 0
    %v60 = vsel %vm40, %v21, 0
    %v63 = vsel %vm40, %v22, 0
    %v66 = vsel %vm40, %v23, 0
    %v69 = vsel %vm40, %v24, 0
    %v72 = vsel %vm40, %v25, 0
    %v75 = vsel %vm40, %v26, 0
    %v78 = vsel %vm40, %v27, 0
    %v81 = vsel %vm40, %v28, 0
    %v84 = vsel %vm40, %v29, 0
    %v87 = vsel %vm40, %v30, 0
    %v90 = vsel %vm40, %v31, 0
    %v93 = vsel %vm40, %v32, 0
    %95 = vmatprep.subr.mxu0 0.0
    %96 = vmatpush1.xpose.msra.mxu0 %v48
    %97 = vmatprep.subr.mxu0 0.0
    %98 = vmatpush1.xpose.msra.mxu0 %v51
    %99 = vmatprep.subr.mxu0 0.0
    %100 = vmatpush1.xpose.msra.mxu0 %v54
    %101 = vmatprep.subr.mxu0 0.0
    %102 = vmatpush1.xpose.msra.mxu0 %v57
    %103 = vmatprep.subr.mxu0 0.0
    %104 = vmatpush1.xpose.msra.mxu0 %v60
    %105 = vmatprep.subr.mxu0 0.0
    %106 = vmatpush1.xpose.msra.mxu0 %v63
    %107 = vmatprep.subr.mxu0 0.0
    %108 = vmatpush1.xpose.msra.mxu0 %v66
    %109 = vmatprep.subr.mxu0 0.0
    %110 = vmatpush1.xpose.msra.mxu0 %v69
    %111 = vmatprep.subr.mxu0 0.0
    %112 = vmatpush1.xpose.msra.mxu0 %v72
    %113 = vmatprep.subr.mxu0 0.0
    %114 = vmatpush1.xpose.msra.mxu0 %v75
    %115 = vmatprep.subr.mxu0 0.0
    %116 = vmatpush1.xpose.msra.mxu0 %v78
    %117 = vmatprep.subr.mxu0 0.0
    %118 = vmatpush1.xpose.msra.mxu0 %v81
    %119 = vmatprep.subr.mxu0 0.0
    %120 = vmatpush1.xpose.msra.mxu0 %v84
    %121 = vmatprep.subr.mxu0 0.0
    %122 = vmatpush1.xpose.msra.mxu0 %v87
    %123 = vmatprep.subr.mxu0 0.0
    %124 = vmatpush1.xpose.msra.mxu0 %v90
    %125 = vmatprep.subr.mxu0 0.0
    %126 = vmatpush1.xpose.msra.mxu0 %v93
    %127 = vmatprep.subr.mxu0 0.0
    %128 = vmatpush1.xpose.msra.mxu0 0.0
    %129 = vmatprep.subr.mxu0 0.0
    %130 = vmatpush1.xpose.msra.mxu0 0.0
    %131 = vmatprep.subr.mxu0 0.0
    %132 = vmatpush1.xpose.msra.mxu0 0.0
    %133 = vmatprep.subr.mxu0 0.0
    %134 = vmatpush1.xpose.msra.mxu0 0.0
    %135 = vmatprep.subr.mxu0 0.0
    %136 = vmatpush1.xpose.msra.mxu0 0.0
    %137 = vmatprep.subr.mxu0 0.0
    %138 = vmatpush1.xpose.msra.mxu0 0.0
    %139 = vmatprep.subr.mxu0 0.0
    %140 = vmatpush1.xpose.msra.mxu0 0.0
    %141 = vmatprep.subr.mxu0 0.0
    %142 = vmatpush1.xpose.msra.mxu0 0.0
    %143 = vmatprep.subr.mxu0 0.0
    %144 = vmatpush1.xpose.msra.mxu0 0.0
    %145 = vmatprep.subr.mxu0 0.0
    %146 = vmatpush1.xpose.msra.mxu0 0.0
    %147 = vmatprep.subr.mxu0 0.0
    %148 = vmatpush1.xpose.msra.mxu0 0.0
    %149 = vmatprep.subr.mxu0 0.0
    %150 = vmatpush1.xpose.msra.mxu0 0.0
    %151 = vmatprep.subr.mxu0 0.0
    %152 = vmatpush1.xpose.msra.mxu0 0.0
    %153 = vmatprep.subr.mxu0 0.0
    %154 = vmatpush1.xpose.msra.mxu0 0.0
    %155 = vmatprep.subr.mxu0 0.0
    %156 = vmatpush1.xpose.msra.mxu0 0.0
    %157 = vmatprep.subr.mxu0 0.0
    %158 = vmatpush1.xpose.msra.mxu0 0.0
    %159 = vmatprep.mubr.f32.mxu0 0.0
    %160 = vmatmul.mubr.f32.gmra.mrb[0].mxu0 %v42
    %v161 = vpop.f32.mrb[0].mxu0
    %v162 = vadd.f32 %v38, %v161
    %v163 = vpop.f32.mrb[0].mxu0
    %164 = vmatprep.mubr.f32.mxu0 0.0
    %165 = vmatmul.mubr.f32.gmra.mrb[0].mxu0 %v45
    %v166 = vpop.f32.mrb[0].mxu0
    %v167 = vadd.f32 %v38, %v166
    %v168 = vpop.f32.mrb[0].mxu0
    %169 = vdwg.mxu0
    %170 = vst [vmem:[#allocation2] sm:$0xff] %v162
    %171 = vst [vmem:[#allocation2 + $0x8] sm:$0xff] %v167
    // Predicated region
    $region14: #{tpu_custom_call.1} parent=1 // pred_check
      _
    $region15: #{tpu_custom_call.1} parent=1 // pred_check_branch
      %173 = sbr.rel (0) target = $region17
    $region16: #{tpu_custom_call.1} parent=1 // pred_region
      %s175 = ssub.s32 256, 256
      %176 = vsyncadd [#allocation3], %s175
      %s177 = sshll.u32 [#allocation2], 4
      %s178 = int_to_ptr.vmem [resolvable:$true] %s177
      %183 = dma.vmem_to_hbm [thread:$0]  %s178, 256, %s3, [#allocation3], 128, 128, 8
    $region17: #{tpu_custom_call.1} parent=1 // pred_fallthru
      _
    // Predicated region
    $region18: #{tpu_custom_call.1} parent=1 // pred_check
      _
    $region19: #{tpu_custom_call.1} parent=1 // pred_check_branch
      %185 = sbr.rel (0) target = $region21
    $region20: #{tpu_custom_call.1} parent=1 // pred_region
      %186 = dma.done [#allocation3], 256
    $region21: #{tpu_custom_call.1} parent=1 // pred_fallthru
      _
    %187 = vsyncpa [#allocation3], 1

</llo_original>
